<compile_context>
chip_gen: v5e
topology: v5e:2x2
jax: 0.10.0
libtpu: 0.0.40
codegen_flags: <defaults>
</compile_context>

<pallas_src>
import jax
import jax.numpy as jnp
import numpy as np
from jax.experimental import pallas as pl
from jax.experimental.pallas import tpu as pltpu


# ---------------------------------------------------------------------------
# Kernels (pure VPU elementwise, fp32 math, cast back to input dtype)
# ---------------------------------------------------------------------------
def _actnorm_affine_kernel(x_ref, scale_ref, shift_ref, z_ref):
    # x: (1, C, tile_t) or (R, tile_t); scale/shift: (1, C, 1) or (R, 1)
    x = x_ref[...].astype(jnp.float32)
    z_ref[...] = (scale_ref[...] * x + shift_ref[...]).astype(z_ref.dtype)


def _actnorm_affine_mask_kernel(x_ref, mask_ref, scale_ref, shift_ref, z_ref):
    # x: (1, C, tile_t); mask: (1, 1, tile_t); scale/shift: (1, C, 1)
    x = x_ref[...].astype(jnp.float32)
    mask = mask_ref[...].astype(jnp.float32)
    z_ref[...] = ((scale_ref[...] * x + shift_ref[...]) * mask).astype(z_ref.dtype)


# ---------------------------------------------------------------------------
# Tiling / VMEM helpers
# ---------------------------------------------------------------------------
def _round_up(v, m):
    return (v + m - 1) // m * m


def _cdiv(a, b):
    return -(-a // b)


def _vmem_limit_bytes():
    """Generation-aware VMEM budget: ~half of physical VMEM
    (=> 64 MiB on v5e/v6e which have 128 MiB, 32 MiB on v7x's 64 MiB)."""
    cap = 64 << 20
    try:
        info = pltpu.get_tpu_info()
        cap = int(getattr(info, "vmem_capacity_bytes", cap))
    except Exception:
        pass
    return int(min(max(cap // 2, 32 << 20), 96 << 20))


def _pick_tile_t(rows, T, vmem_limit_bytes, has_mask):
    """Largest lane-aligned tile_t whose double-buffered working set
    (2*x + 2*z [+ 2*mask], fp32, sublane-padded rows) stays within ~3/4 of the
    VMEM budget; additionally capped at a ~4 MiB x tile (already well past the
    measured HBM-roofline saturation point)."""
    rows8 = max(_round_up(rows, 8), 8)
    mask_rows8 = 8 if has_mask else 0
    per_col = 2 * (2 * rows8 + mask_rows8) * 4          # bytes per column of tile_t
    budget_cols = (vmem_limit_bytes * 3 // 4) // per_col
    cap_cols = (4 << 20) // (rows8 * 4)                  # ~4 MiB x tile cap
    max_tile = max(128, (min(budget_cols, cap_cols) // 128) * 128)
    T128 = _round_up(T, 128)
    if T128 <= max_tile:
        return T128
    n_t = _cdiv(T128, max_tile)
    return _round_up(_cdiv(T128, n_t), 128)              # balanced, <= max_tile


# ---------------------------------------------------------------------------
# Wrapper
# ---------------------------------------------------------------------------
def actnorm_forward(x, logs, bias, x_mask=None, *, reverse=False, tile_t=None,
                    _force_3d=False):
    """x: (B, C, T); logs, bias: (1, C, 1) (PyTorch layout).
    Returns (z (B, C, T), logdet (B,)) forward, (z, None) reverse."""
    B, C, T = x.shape
    out_dtype = x.dtype
    has_mask = x_mask is not None

    logs = jnp.asarray(logs, jnp.float32).reshape(1, C, 1)
    bias = jnp.asarray(bias, jnp.float32).reshape(1, C, 1)

    # Precompute the affine params once (no per-grid-step exp in the kernel).
    if reverse:
        scale = jnp.exp(-logs)
        shift = -bias * scale
    else:
        scale = jnp.exp(logs)
        shift = bias

    # logdet fully in the wrapper -> kernel has no revisited block, both grid
    # axes can be megacore-parallel.
    if reverse:
        logdet = None
    else:
        if has_mask:
            x_len = jnp.sum(x_mask, axis=(1, 2)).astype(jnp.float32)
        else:
            x_len = jnp.full((B,), float(T), jnp.float32)
        logdet = jnp.sum(logs) * x_len

    vmem_limit = _vmem_limit_bytes()

    # No-mask path: collapse (B, C) into one sublane-dense row axis.
    use_2d = ((not has_mask) and (not _force_3d)
              and _round_up(max(B * C, 8), 8) * 128 * 4 * 6 <= vmem_limit)
    rows = B * C if use_2d else C

    if tile_t is None:
        tile_t = _pick_tile_t(rows, T, vmem_limit, has_mask)
    else:
        tile_t = max(128, _round_up(int(tile_t), 128))
        tile_t = min(tile_t, _round_up(T, 128))

    n_t = _cdiv(T, tile_t)
    T_pad = n_t * tile_t
    pad = T_pad - T

    x_in = x if pad == 0 else jnp.pad(x, ((0, 0), (0, 0), (0, pad)))
    if has_mask:
        mask_in = x_mask if pad == 0 else jnp.pad(x_mask, ((0, 0), (0, 0), (0, pad)))

    if use_2d:
        R = B * C
        x2 = x_in.reshape(R, T_pad)
        scale2 = jnp.broadcast_to(scale, (B, C, 1)).reshape(R, 1)
        shift2 = jnp.broadcast_to(shift, (B, C, 1)).reshape(R, 1)
        z = pl.pallas_call(
            _actnorm_affine_kernel,
            grid=(n_t,),
            in_specs=[
                pl.BlockSpec((R, tile_t), lambda t: (0, t)),     # x (lane-dense)
                pl.BlockSpec((R, 1), lambda t: (0, 0)),          # scale (resident)
                pl.BlockSpec((R, 1), lambda t: (0, 0)),          # shift (resident)
            ],
            out_specs=pl.BlockSpec((R, tile_t), lambda t: (0, t)),
            out_shape=jax.ShapeDtypeStruct((R, T_pad), out_dtype),
            compiler_params=pltpu.CompilerParams(
                dimension_semantics=("parallel",),
                vmem_limit_bytes=vmem_limit),
        )(x2, scale2, shift2)
        z = z.reshape(B, C, T_pad)
    elif has_mask:
        # TODO(synk): for C not a multiple of 8 *with* a mask, fp32 sublane
        # padding still moves up to 2x the useful bytes; collapsing B into the
        # sublane axis would need a per-row mask stream (C x more mask bytes).
        z = pl.pallas_call(
            _actnorm_affine_mask_kernel,
            grid=(B, n_t),
            in_specs=[
                pl.BlockSpec((1, C, tile_t), lambda b, t: (b, 0, t)),  # x
                pl.BlockSpec((1, 1, tile_t), lambda b, t: (b, 0, t)),  # mask
                pl.BlockSpec((1, C, 1), lambda b, t: (0, 0, 0)),       # scale
                pl.BlockSpec((1, C, 1), lambda b, t: (0, 0, 0)),       # shift
            ],
            out_specs=pl.BlockSpec((1, C, tile_t), lambda b, t: (b, 0, t)),
            out_shape=jax.ShapeDtypeStruct((B, C, T_pad), out_dtype),
            compiler_params=pltpu.CompilerParams(
                dimension_semantics=("parallel", "parallel"),
                vmem_limit_bytes=vmem_limit),
        )(x_in, mask_in, scale, shift)
    else:
        z = pl.pallas_call(
            _actnorm_affine_kernel,
            grid=(B, n_t),
            in_specs=[
                pl.BlockSpec((1, C, tile_t), lambda b, t: (b, 0, t)),  # x
                pl.BlockSpec((1, C, 1), lambda b, t: (0, 0, 0)),       # scale
                pl.BlockSpec((1, C, 1), lambda b, t: (0, 0, 0)),       # shift
            ],
            out_specs=pl.BlockSpec((1, C, tile_t), lambda b, t: (b, 0, t)),
            out_shape=jax.ShapeDtypeStruct((B, C, T_pad), out_dtype),
            compiler_params=pltpu.CompilerParams(
                dimension_semantics=("parallel", "parallel"),
                vmem_limit_bytes=vmem_limit),
        )(x_in, scale, shift)

    if pad:
        z = z[..., :T]
    return z, logdet


def actnorm_initialize(x, x_mask):
    """Data-dependent init (ddi=True path), plain JAX: returns (logs, bias).
    TODO(synk): the `initialized` flag / in-place nn.Parameter update is
    host-side module state with no Pallas equivalent (one-time, not hot path)."""
    denom = jnp.sum(x_mask, axis=(0, 2))
    m = jnp.sum(x * x_mask, axis=(0, 2)) / denom
    m_sq = jnp.sum(x * x * x_mask, axis=(0, 2)) / denom
    v = m_sq - m ** 2
    logs = 0.5 * jnp.log(jnp.clip(v, 1e-6, None))
    return (-logs).reshape(1, -1, 1), (-m * jnp.exp(-logs)).reshape(1, -1, 1)


# ---------------------------------------------------------------------------
# Pure-JAX reference mirroring the PyTorch forward
# ---------------------------------------------------------------------------
def ref_actnorm(x, logs, bias, x_mask=None, reverse=False):
    B, C, T = x.shape
    if x_mask is None:
        x_mask = jnp.ones((B, 1, T), jnp.float32)
    logs = logs.reshape(1, C, 1)
    bias = bias.reshape(1, C, 1)
    if reverse:
        return (x - bias) * jnp.exp(-logs) * x_mask, None
    z = (bias + jnp.exp(logs) * x) * x_mask
    x_len = jnp.sum(x_mask, axis=(1, 2))
    logdet = jnp.sum(logs) * x_len
    return z, logdet


if __name__ == "__main__":
    key = jax.random.PRNGKey(0)
    kx, kl, kb = jax.random.split(key, 3)

    # --- small shape consistent with the module: B=2, channels=4, T=16 ------
    B, C, T = 2, 4, 16
    x = jax.random.normal(kx, (B, C, T), jnp.float32)
    lengths = jnp.array([T, T - 5])
    x_mask = (jnp.arange(T)[None, None, :] < lengths[:, None, None]).astype(jnp.float32)
    logs = 0.3 * jax.random.normal(kl, (1, C, 1), jnp.float32)
    bias = 0.3 * jax.random.normal(kb, (1, C, 1), jnp.float32)

    # masked forward (3D path, padded T=16 -> 128, pad sliced off)
    z, logdet = actnorm_forward(x, logs, bias, x_mask=x_mask)
    z = jax.block_until_ready(z); logdet = jax.block_until_ready(logdet)
    z_ref, logdet_ref = ref_actnorm(x, logs, bias, x_mask=x_mask)
    assert np.allclose(np.asarray(z), np.asarray(z_ref), atol=1e-5, rtol=1e-5)
    assert np.allclose(np.asarray(logdet), np.asarray(logdet_ref), atol=1e-4, rtol=1e-4)

    # reverse path inverts the forward on the unmasked region
    x_rec, ld_none = actnorm_forward(z, logs, bias, x_mask=x_mask, reverse=True)
    x_rec = jax.block_until_ready(x_rec)
    assert ld_none is None
    assert np.allclose(np.asarray(x_rec), np.asarray(x * x_mask), atol=1e-5, rtol=1e-5)

    # mask=None forward/reverse (collapsed 2D sublane-dense path, C=4)
    z0, ld0 = actnorm_forward(x, logs, bias)
    z0 = jax.block_until_ready(z0); ld0 = jax.block_until_ready(ld0)
    z0_ref, ld0_ref = ref_actnorm(x, logs, bias)
    assert np.allclose(np.asarray(z0), np.asarray(z0_ref), atol=1e-5, rtol=1e-5)
    assert np.allclose(np.asarray(ld0), np.asarray(ld0_ref), atol=1e-4, rtol=1e-4)
    x0_rec, _ = actnorm_forward(z0, logs, bias, reverse=True)
    x0_rec = jax.block_until_ready(x0_rec)
    assert np.allclose(np.asarray(x0_rec), np.asarray(x), atol=1e-5, rtol=1e-5)

    # mask=None, forced 3D path (coverage of the no-mask 3D kernel)
    z1, ld1 = actnorm_forward(x, logs, bias, _force_3d=True)
    z1 = jax.block_until_ready(z1)
    assert np.allclose(np.asarray(z1), np.asarray(z0_ref), atol=1e-5, rtol=1e-5)

    # --- lane-aligned shape exercising the T-tiled grid ----------------------
    B2, C2, T2 = 2, 8, 512
    x2 = jax.random.normal(kx, (B2, C2, T2), jnp.float32)
    lengths2 = jnp.array([T2, T2 - 200])
    mask2 = (jnp.arange(T2)[None, None, :] < lengths2[:, None, None]).astype(jnp.float32)
    logs2 = 0.1 * jax.random.normal(kl, (1, C2, 1), jnp.float32)
    bias2 = 0.1 * jax.random.normal(kb, (1, C2, 1), jnp.float32)
    z2, ld2 = actnorm_forward(x2, logs2, bias2, x_mask=mask2, tile_t=128)   # 4 T tiles
    z2 = jax.block_until_ready(z2); ld2 = jax.block_until_ready(ld2)
    z2_ref, ld2_ref = ref_actnorm(x2, logs2, bias2, x_mask=mask2)
    assert np.allclose(np.asarray(z2), np.asarray(z2_ref), atol=1e-5, rtol=1e-5)
    assert np.allclose(np.asarray(ld2), np.asarray(ld2_ref), atol=1e-3, rtol=1e-4)

    # --- unaligned T with multi-tile + padding, masked ------------------------
    B3, C3, T3 = 2, 16, 1000
    x3 = jax.random.normal(kx, (B3, C3, T3), jnp.float32)
    lengths3 = jnp.array([T3, T3 - 333])
    mask3 = (jnp.arange(T3)[None, None, :] < lengths3[:, None, None]).astype(jnp.float32)
    logs3 = 0.1 * jax.random.normal(kl, (1, C3, 1), jnp.float32)
    bias3 = 0.1 * jax.random.normal(kb, (1, C3, 1), jnp.float32)
    z3, ld3 = actnorm_forward(x3, logs3, bias3, x_mask=mask3, tile_t=256)   # pad 1000->1024
    z3 = jax.block_until_ready(z3); ld3 = jax.block_until_ready(ld3)
    z3_ref, ld3_ref = ref_actnorm(x3, logs3, bias3, x_mask=mask3)
    assert np.allclose(np.asarray(z3), np.asarray(z3_ref), atol=1e-5, rtol=1e-5)
    assert np.allclose(np.asarray(ld3), np.asarray(ld3_ref), atol=1e-3, rtol=1e-4)

    print("KERNEL_OK")
</pallas_src>

<mosaic_0001>
module attributes {stable_mosaic.version = 11 : i64} {
  func.func @_actnorm_affine_mask_kernel(%arg0: i32, %arg1: i32, %arg2: memref<1x4x128xf32, #tpu.memory_space<vmem>>, %arg3: memref<1x1x128xf32, #tpu.memory_space<vmem>>, %arg4: memref<1x4x1xf32, #tpu.memory_space<vmem>>, %arg5: memref<1x4x1xf32, #tpu.memory_space<vmem>>, %arg6: memref<1x4x128xf32, #tpu.memory_space<vmem>>) attributes {dimension_semantics = [#tpu.dimension_semantics<parallel>, #tpu.dimension_semantics<parallel>], iteration_bounds = array<i64: 2, 1>, scalar_prefetch = 0 : i64, scratch_operands = 0 : i64, tpu.core_type = #tpu.core_type<tc>, window_params = [{transform_indices = @transform_0, window_bounds = array<i64: 1, 4, 128>}, {transform_indices = @transform_1, window_bounds = array<i64: 1, 1, 128>}, {pipeline_mode = #tpu.pipeline_mode<synchronous>, transform_indices = @transform_2, window_bounds = array<i64: 1, 4, 1>}, {pipeline_mode = #tpu.pipeline_mode<synchronous>, transform_indices = @transform_3, window_bounds = array<i64: 1, 4, 1>}, {transform_indices = @transform_4, window_bounds = array<i64: 1, 4, 128>}]} {
    %c0 = arith.constant 0 : index
    %c0_0 = arith.constant 0 : index
    %c0_1 = arith.constant 0 : index
    %0 = vector.load %arg2[%c0, %c0_0, %c0_1] : memref<1x4x128xf32, #tpu.memory_space<vmem>>, vector<1x4x128xf32>
    %c0_2 = arith.constant 0 : index
    %c0_3 = arith.constant 0 : index
    %c0_4 = arith.constant 0 : index
    %1 = vector.load %arg3[%c0_2, %c0_3, %c0_4] : memref<1x1x128xf32, #tpu.memory_space<vmem>>, vector<1x1x128xf32>
    %c0_5 = arith.constant 0 : index
    %c0_6 = arith.constant 0 : index
    %c0_7 = arith.constant 0 : index
    %2 = vector.load %arg4[%c0_5, %c0_6, %c0_7] : memref<1x4x1xf32, #tpu.memory_space<vmem>>, vector<1x4x1xf32>
    %3 = vector.broadcast %2 : vector<1x4x1xf32> to vector<1x4x128xf32>
    %4 = arith.mulf %3, %0 : vector<1x4x128xf32>
    %c0_8 = arith.constant 0 : index
    %c0_9 = arith.constant 0 : index
    %c0_10 = arith.constant 0 : index
    %5 = vector.load %arg5[%c0_8, %c0_9, %c0_10] : memref<1x4x1xf32, #tpu.memory_space<vmem>>, vector<1x4x1xf32>
    %6 = vector.broadcast %5 : vector<1x4x1xf32> to vector<1x4x128xf32>
    %7 = arith.addf %4, %6 : vector<1x4x128xf32>
    %8 = vector.broadcast %1 : vector<1x1x128xf32> to vector<1x4x128xf32>
    %9 = arith.mulf %7, %8 : vector<1x4x128xf32>
    %c0_11 = arith.constant 0 : index
    %c0_12 = arith.constant 0 : index
    %c0_13 = arith.constant 0 : index
    %10 = vector.load %arg6[%c0_11, %c0_12, %c0_13] : memref<1x4x128xf32, #tpu.memory_space<vmem>>, vector<1x4x128xf32>
    tpu.vector_store %arg6[%c0_11, %c0_12, %c0_13], %9 {strides = array<i32>} : memref<1x4x128xf32, #tpu.memory_space<vmem>>, vector<1x4x128xf32>,
    return
  }
  func.func @transform_0(%arg0: i32, %arg1: i32) -> (i32, i32, i32) {
    %c0_i32 = arith.constant 0 : i32
    %c0_i32_0 = arith.constant 0 : i32
    return %arg0, %c0_i32, %arg1 : i32, i32, i32
  }
  func.func @transform_1(%arg0: i32, %arg1: i32) -> (i32, i32, i32) {
    %c0_i32 = arith.constant 0 : i32
    %c0_i32_0 = arith.constant 0 : i32
    return %arg0, %c0_i32, %arg1 : i32, i32, i32
  }
  func.func @transform_2(%arg0: i32, %arg1: i32) -> (i32, i32, i32) {
    %c0_i32 = arith.constant 0 : i32
    %c0_i32_0 = arith.constant 0 : i32
    %c0_i32_1 = arith.constant 0 : i32
    %c0_i32_2 = arith.constant 0 : i32
    return %c0_i32, %c0_i32_0, %c0_i32_1 : i32, i32, i32
  }
  func.func @transform_3(%arg0: i32, %arg1: i32) -> (i32, i32, i32) {
    %c0_i32 = arith.constant 0 : i32
    %c0_i32_0 = arith.constant 0 : i32
    %c0_i32_1 = arith.constant 0 : i32
    %c0_i32_2 = arith.constant 0 : i32
    return %c0_i32, %c0_i32_0, %c0_i32_1 : i32, i32, i32
  }
  func.func @transform_4(%arg0: i32, %arg1: i32) -> (i32, i32, i32) {
    %c0_i32 = arith.constant 0 : i32
    %c0_i32_0 = arith.constant 0 : i32
    return %arg0, %c0_i32, %arg1 : i32, i32, i32
  }
}

</mosaic_0001>

<llo_original>
// kernel: tpu_custom_call.1
$region0: #{tpu_custom_call.1}
  #allocation0 [shape = 'u32[]', space=smem, size = 0x4, offset = 0x4, fixed_abs, tag = 'smem constant byte address 0x4 - core index']
  #allocation1 [shape = 'u32[72,128]{1,0:T(1,128)}', space=vmem, size = 0x9000, scoped, tag = 'internal scratch']
  %s0 = inlined_call_operand.vmem [shape: f32[2,4,128], index: 0, kind: input, shape index: {}]
  %s1 = inlined_call_operand.hbm [shape: f32[2,1,128], index: 1, kind: input, shape index: {}]
  %s2 = inlined_call_operand.vmem [shape: f32[1,4,1], index: 2, kind: input, shape index: {}]
  %s3 = inlined_call_operand.vmem [shape: f32[1,4,1], index: 3, kind: input, shape index: {}]
  %s4 = inlined_call_operand.hbm [shape: f32[2,4,128], index: 4, kind: output, shape index: {}]
  %s5 = sld [smem:[#allocation0]]
  $region53: #{tpu_custom_call.1} parent=0
    _
  %s7 = ssub.s32 1, %s5
  %s8 = scalar_select 0, %s7, %s5
  $region1: #{tpu_custom_call.1} parent=0
    #allocation2 [shape = 'u8[1024]{0}', space=vmem, size = 0x400, scoped, tag = 'input window, operand 1']
    #allocation3 [shape = 's32[2]{0}', space=sflag, size = 0x8, scoped, tag = 'scoped memory for tpu_custom_call.1']
    #allocation4 [shape = 's32[2]{0}', space=sflag, size = 0x8, scoped, tag = 'scoped memory for tpu_custom_call.1']
    #allocation5 [shape = 'u8[4096]{0}', space=vmem, size = 0x1000, scoped, tag = 'output window, operand 0']
    %9 = vsyncpa [#allocation3], 0
    %s10 = scalar_lea.sflag [#allocation3], 1
    %11 = vsyncpa %s10, 0
    %12 = vsyncpa [#allocation4], 0
    %s13 = scalar_lea.sflag [#allocation4], 1
    %14 = vsyncpa %s13, 0
    loop: start=0, step=1, limit=4
    $region2: #{tpu_custom_call.1} parent=1 // loop_pre_header
      _
    $region3: #{tpu_custom_call.1} parent=1 // loop_header
      %s16 = sphi 0, %s20
      %p17 = scmp.ge.s32.totalorder %s16, 4
      %s23 = sphi 0, %s35
      %s24 = sphi 0, %s31
      %s25 = sphi 0, %s23
      %s26 = sphi 0, %s24
      %s27 = sphi 0, %s25
      %s28 = sphi 0, %s26
      %s40 = sphi 0, %s42
      %s43 = sphi 0, %s40
      %s44 = sphi 0, %s43
      %s60 = sphi 0, %s44
      %s68 = sphi 0, %s70
      %s71 = sphi 0, %s68
      %s72 = sphi 0, %s71
      %s88 = sphi 0, %s72
      %s92 = sphi 0, %s92
      %s94 = sphi 0, %s92
      %s95 = sphi 0, %s94
      %s109 = sphi 0, %s95
      %s113 = sphi 0, %s113
      %s115 = sphi 0, %s113
      %s116 = sphi 0, %s115
      %s130 = sphi 0, %s116
      %s138 = sphi 0, %s140
      %s141 = sphi 0, %s138
      %s142 = sphi 0, %s141
      %s158 = sphi 0, %s142
    $region4: #{tpu_custom_call.1} parent=1 // loop_header_branch
      %19 = sbr.rel (%p17) target = $region8
    $region5: #{tpu_custom_call.1} parent=1 // loop_body
      %s21 = ssub.s32 %s16, 1
      %s22 = ssub.s32 %s16, 2
      %s29 = sadd.s32 1, %s24
      %p30 = scmp.ge.s32.totalorder %s29, 1
      %s31 = scalar_select %p30, 0, %s29
      %s32 = sadd.s32 1, %s23
      %s33 = scalar_select %p30, %s32, %s23
      %p34 = scmp.ge.s32.totalorder %s33, 2
      %s35 = scalar_select %p34, 0, %s33
      %s36 = ssub.s32 %s23, %s35
      %s37 = ssub.s32 %s24, %s31
      %s38 = sor.u32 %s36, %s37
      %p39 = scmp.eq.s32.totalorder %s38, 0
      %s41 = sadd.s32 %s40, 1
      %s42 = scalar_select %p39, %s40, %s41
      %p45 = pneg %p39
      %p46 = scmp.eq.s32.totalorder %s16, 1
      %p47 = por %p45, %p46
      %p48 = scmp.ne.s32.totalorder %s40, %s43
      %p49 = scmp.eq.s32.totalorder %s16, 0
      %p50 = por %p48, %p49
      %p51 = scmp.ne.s32.totalorder %s40, %s43
      %p52 = scmp.eq.s32.totalorder %s21, 1
      %p53 = por %p51, %p52
      %p54 = scmp.ne.s32.totalorder %s43, %s44
      %p55 = scmp.eq.s32.totalorder %s21, 0
      %p56 = por %p54, %p55
      %p57 = scmp.ne.s32.totalorder %s43, %s44
      %p58 = scmp.eq.s32.totalorder %s22, 1
      %p59 = por %p57, %p58
      %p61 = scmp.ne.s32.totalorder %s44, %s60
      %p62 = scmp.eq.s32.totalorder %s22, 0
      %p63 = por %p61, %p62
      %s64 = ssub.s32 %s23, %s35
      %s65 = ssub.s32 %s24, %s31
      %s66 = sor.u32 %s64, %s65
      %p67 = scmp.eq.s32.totalorder %s66, 0
      %s69 = sadd.s32 %s68, 1
      %s70 = scalar_select %p67, %s68, %s69
      %p73 = pneg %p67
      %p74 = scmp.eq.s32.totalorder %s16, 1
      %p75 = por %p73, %p74
      %p76 = scmp.ne.s32.totalorder %s68, %s71
      %p77 = scmp.eq.s32.totalorder %s16, 0
      %p78 = por %p76, %p77
      %p79 = scmp.ne.s32.totalorder %s68, %s71
      %p80 = scmp.eq.s32.totalorder %s21, 1
      %p81 = por %p79, %p80
      %p82 = scmp.ne.s32.totalorder %s71, %s72
      %p83 = scmp.eq.s32.totalorder %s21, 0
      %p84 = por %p82, %p83
      %p85 = scmp.ne.s32.totalorder %s71, %s72
      %p86 = scmp.eq.s32.totalorder %s22, 1
      %p87 = por %p85, %p86
      %p89 = scmp.ne.s32.totalorder %s72, %s88
      %p90 = scmp.eq.s32.totalorder %s22, 0
      %p91 = por %p89, %p90
      %s93 = sadd.s32 %s92, 1
      %p96 = scmp.eq.s32.totalorder %s16, 1
      %p97 = scmp.ne.s32.totalorder %s92, %s94
      %p98 = scmp.eq.s32.totalorder %s16, 0
      %p99 = por %p97, %p98
      %p100 = scmp.ne.s32.totalorder %s92, %s94
      %p101 = scmp.eq.s32.totalorder %s21, 1
      %p102 = por %p100, %p101
      %p103 = scmp.ne.s32.totalorder %s94, %s95
      %p104 = scmp.eq.s32.totalorder %s21, 0
      %p105 = por %p103, %p104
      %p106 = scmp.ne.s32.totalorder %s94, %s95
      %p107 = scmp.eq.s32.totalorder %s22, 1
      %p108 = por %p106, %p107
      %p110 = scmp.ne.s32.totalorder %s95, %s109
      %p111 = scmp.eq.s32.totalorder %s22, 0
      %p112 = por %p110, %p111
      %s114 = sadd.s32 %s113, 1
      %p117 = scmp.eq.s32.totalorder %s16, 1
      %p118 = scmp.ne.s32.totalorder %s113, %s115
      %p119 = scmp.eq.s32.totalorder %s16, 0
      %p120 = por %p118, %p119
      %p121 = scmp.ne.s32.totalorder %s113, %s115
      %p122 = scmp.eq.s32.totalorder %s21, 1
      %p123 = por %p121, %p122
      %p124 = scmp.ne.s32.totalorder %s115, %s116
      %p125 = scmp.eq.s32.totalorder %s21, 0
      %p126 = por %p124, %p125
      %p127 = scmp.ne.s32.totalorder %s115, %s116
      %p128 = scmp.eq.s32.totalorder %s22, 1
      %p129 = por %p127, %p128
      %p131 = scmp.ne.s32.totalorder %s116, %s130
      %p132 = scmp.eq.s32.totalorder %s22, 0
      %p133 = por %p131, %p132
      %s134 = ssub.s32 %s23, %s35
      %s135 = ssub.s32 %s24, %s31
      %s136 = sor.u32 %s134, %s135
      %p137 = scmp.eq.s32.totalorder %s136, 0
      %s139 = sadd.s32 %s138, 1
      %s140 = scalar_select %p137, %s138, %s139
      %p143 = pneg %p137
      %p144 = scmp.eq.s32.totalorder %s16, 1
      %p145 = por %p143, %p144
      %p146 = scmp.ne.s32.totalorder %s138, %s141
      %p147 = scmp.eq.s32.totalorder %s16, 0
      %p148 = por %p146, %p147
      %p149 = scmp.ne.s32.totalorder %s138, %s141
      %p150 = scmp.eq.s32.totalorder %s21, 1
      %p151 = por %p149, %p150
      %p152 = scmp.ne.s32.totalorder %s141, %s142
      %p153 = scmp.eq.s32.totalorder %s21, 0
      %p154 = por %p152, %p153
      %p155 = scmp.ne.s32.totalorder %s141, %s142
      %p156 = scmp.eq.s32.totalorder %s22, 1
      %p157 = por %p155, %p156
      %p159 = scmp.ne.s32.totalorder %s142, %s158
      %p160 = scmp.eq.s32.totalorder %s22, 0
      %p161 = por %p159, %p160
      %p162 = scmp.le.s32.totalorder 1, %s16
      %p163 = scmp.lt.s32.totalorder %s16, 3
      %p164 = pnand %p162, %p163
      %p165 = pneg %p164
      // Predicated region
      $region9: #{tpu_custom_call.1} parent=5 // pred_check
        _
      $region10: #{tpu_custom_call.1} parent=5 // pred_check_branch
        %167 = sbr.rel (%p164) target = $region12
      $region11: #{tpu_custom_call.1} parent=5 // pred_region
        %s168 = ssub.s32 %s16, 1
        // Predicated region
        $region13: #{tpu_custom_call.1} parent=11 // pred_check
          %p169 = pneg %p105
        $region14: #{tpu_custom_call.1} parent=11 // pred_check_branch
          %171 = sbr.rel (%p169) target = $region16
        $region15: #{tpu_custom_call.1} parent=11 // pred_region
          _
        $region16: #{tpu_custom_call.1} parent=11 // pred_fallthru
          _
        // Predicated region
        $region17: #{tpu_custom_call.1} parent=11 // pred_check
          %p172 = pneg %p126
        $region18: #{tpu_custom_call.1} parent=11 // pred_check_branch
          %174 = sbr.rel (%p172) target = $region20
        $region19: #{tpu_custom_call.1} parent=11 // pred_region
          _
        $region20: #{tpu_custom_call.1} parent=11 // pred_fallthru
          _
      $region12: #{tpu_custom_call.1} parent=5 // pred_fallthru
        _
      %p175 = scmp.lt.s32.totalorder %s16, 2
      // Predicated region
      $region21: #{tpu_custom_call.1} parent=5 // pred_check
        %p176 = pneg %p175
      $region22: #{tpu_custom_call.1} parent=5 // pred_check_branch
        %178 = sbr.rel (%p176) target = $region24
      $region23: #{tpu_custom_call.1} parent=5 // pred_region
        // Predicated region
        $region25: #{tpu_custom_call.1} parent=23 // pred_check
          %p179 = pneg %p50
        $region26: #{tpu_custom_call.1} parent=23 // pred_check_branch
          %181 = sbr.rel (%p179) target = $region28
        $region27: #{tpu_custom_call.1} parent=23 // pred_region
          %p182 = scmp.lt.s32.totalorder %s23, 1
          %s183 = scalar_select %p182, %s23, 1
          %p184 = scmp.lt.s32.totalorder %s24, 0
          %s185 = scalar_select %p184, %s24, 0
          %s186 = sadd.s32 %s185, %s183
          %s187 = smul.addr %s186, 4
          %s188 = scalar_lea.vmem %s0, %s187
        $region28: #{tpu_custom_call.1} parent=23 // pred_fallthru
          _
        // Predicated region
        $region29: #{tpu_custom_call.1} parent=23 // pred_check
          %p189 = pneg %p78
        $region30: #{tpu_custom_call.1} parent=23 // pred_check_branch
          %191 = sbr.rel (%p189) target = $region32
        $region31: #{tpu_custom_call.1} parent=23 // pred_region
          %s192 = sand.u32 %s68, 1
          %s193 = scalar_lea.sflag [#allocation3], %s192
          %s194 = sand.u32 %s68, 1
          %s195 = scalar_lea.vmem [#allocation2], %s194
          %197 = vsyncadd %s193, 0
          %s198 = sadd.s32 %s24, %s23
          %s199 = scalar_lea.hbm %s1, %s198
          %s201 = sshll.u32 %s199, 4
          %s202 = int_to_ptr.hbm [resolvable:$true] %s201
          %s203 = sshll.u32 %s195, 4
          %s204 = int_to_ptr.vmem [resolvable:$true] %s203
          %206 = dma.hbm_to_vmem [thread:$0]  %s202, 16, %s204, %s193
        $region32: #{tpu_custom_call.1} parent=23 // pred_fallthru
          _
      $region24: #{tpu_custom_call.1} parent=5 // pred_fallthru
        _
      %p207 = scmp.le.s32.totalorder 1, %s16
      %p208 = scmp.lt.s32.totalorder %s16, 3
      %p209 = pnand %p207, %p208
      %p210 = pneg %p209
      // Predicated region
      $region33: #{tpu_custom_call.1} parent=5 // pred_check
        _
      $region34: #{tpu_custom_call.1} parent=5 // pred_check_branch
        %212 = sbr.rel (%p209) target = $region36
      $region35: #{tpu_custom_call.1} parent=5 // pred_region
        %s213 = ssub.s32 %s16, 1
        %s214 = sand.u32 %s71, 1
        %s215 = scalar_lea.sflag [#allocation3], %s214
        %s216 = sand.u32 %s71, 1
        %s217 = scalar_lea.vmem [#allocation2], %s216
        // Predicated region
        $region37: #{tpu_custom_call.1} parent=35 // pred_check
          %p218 = pneg %p84
        $region38: #{tpu_custom_call.1} parent=35 // pred_check_branch
          %220 = sbr.rel (%p218) target = $region40
        $region39: #{tpu_custom_call.1} parent=35 // pred_region
          %222 = dma.done %s215, 16
        $region40: #{tpu_custom_call.1} parent=35 // pred_fallthru
          _
        %p223 = scmp.lt.s32.totalorder %s25, 1
        %s224 = scalar_select %p223, %s25, 1
        %p225 = scmp.lt.s32.totalorder %s26, 0
        %s226 = scalar_select %p225, %s26, 0
        %s227 = sadd.s32 %s226, %s224
        %s228 = smul.addr %s227, 4
        %s229 = scalar_lea.vmem %s0, %s228
        %p230 = pneg %p56
        %p231 = pneg %p53
        %s232 = sand.u32 %s71, 1
        %s233 = scalar_lea.sflag [#allocation3], %s232
        %s234 = sand.u32 %s71, 1
        %s235 = scalar_lea.vmem [#allocation2], %s234
        %p236 = pneg %p84
        %p237 = pneg %p81
        %p238 = pneg %p105
        %p239 = pneg %p102
        %p240 = pneg %p126
        %p241 = pneg %p123
        %p242 = pneg %p154
        %p243 = pneg %p151
        %s244 = sand.u32 %s141, 1
        %s245 = scalar_lea.sflag [#allocation4], %s244
        %s246 = sand.u32 %s141, 1
        %s247 = smul.addr %s246, 4
        %s248 = scalar_lea.vmem [#allocation5], %s247
        %p249 = scmp.lt.s32.totalorder %s25, 1
        %s250 = scalar_select %p249, %s25, 1
        %p251 = scmp.lt.s32.totalorder %s26, 0
        %s252 = scalar_select %p251, %s26, 0
        %s253 = sadd.s32 %s252, %s250
        %s254 = smul.addr %s253, 4
        %s255 = scalar_lea.vmem %s0, %s254
        %v256 = vld [vmem:[%s255] sm:$0xf]
        %v257 = vld [vmem:[%s217] sm:$0x1]
        %v258 = vld [vmem:[%s2] sm:$0xf]
        %260 = vset.pattern.permute.xlu0 0
        %261 = vperm.xlu0 %260, %v258
        %v262 = vpop.permute.xlu0 %261
        %v264 = vmul.f32 %v262, %v256
        %v265 = vld [vmem:[%s3] sm:$0xf]
        %267 = vset.pattern.permute.xlu0 0
        %268 = vperm.xlu0 %267, %v265
        %v269 = vpop.permute.xlu0 %268
        %v271 = vadd.f32 %v264, %v269
        %v273 = vperm.slane %v257, 0
        %v275 = vmul.f32 %v271, %v273
        %276 = vst [vmem:[%s248] sm:$0xf] %v275
        %s277 = sand.u32 %s141, 1
        %s278 = scalar_lea.sflag [#allocation4], %s277
        %s279 = sand.u32 %s141, 1
        %s280 = smul.addr %s279, 4
        %s281 = scalar_lea.vmem [#allocation5], %s280
        // Predicated region
        $region41: #{tpu_custom_call.1} parent=35 // pred_check
          %p282 = pneg %p151
        $region42: #{tpu_custom_call.1} parent=35 // pred_check_branch
          %284 = sbr.rel (%p282) target = $region44
        $region43: #{tpu_custom_call.1} parent=35 // pred_region
          %286 = vsyncadd %s278, 0
          %s287 = sadd.s32 %s26, %s25
          %s288 = smul.addr %s287, 4
          %s289 = scalar_lea.hbm %s4, %s288
          %s291 = sshll.u32 %s281, 4
          %s292 = int_to_ptr.vmem [resolvable:$true] %s291
          %s293 = sshll.u32 %s289, 4
          %s294 = int_to_ptr.hbm [resolvable:$true] %s293
          %296 = dma.vmem_to_hbm [thread:$0]  %s292, 64, %s294, %s278
        $region44: #{tpu_custom_call.1} parent=35 // pred_fallthru
          _
      $region36: #{tpu_custom_call.1} parent=5 // pred_fallthru
        _
      %p297 = scmp.le.s32.totalorder 2, %s16
      // Predicated region
      $region45: #{tpu_custom_call.1} parent=5 // pred_check
        %p298 = pneg %p297
      $region46: #{tpu_custom_call.1} parent=5 // pred_check_branch
        %300 = sbr.rel (%p298) target = $region48
      $region47: #{tpu_custom_call.1} parent=5 // pred_region
        %s301 = ssub.s32 %s16, 2
        // Predicated region
        $region49: #{tpu_custom_call.1} parent=47 // pred_check
          %p302 = pneg %p157
        $region50: #{tpu_custom_call.1} parent=47 // pred_check_branch
          %304 = sbr.rel (%p302) target = $region52
        $region51: #{tpu_custom_call.1} parent=47 // pred_region
          %s305 = sand.u32 %s142, 1
          %s306 = scalar_lea.sflag [#allocation4], %s305
          %s307 = sand.u32 %s142, 1
          %s308 = smul.addr %s307, 4
          %s309 = scalar_lea.vmem [#allocation5], %s308
          %311 = dma.done %s306, 64
        $region52: #{tpu_custom_call.1} parent=47 // pred_fallthru
          _
      $region48: #{tpu_custom_call.1} parent=5 // pred_fallthru
        _
    $region6: #{tpu_custom_call.1} parent=1 // loop_footer
      %s20 = sadd.s32 1, %s16
    $region7: #{tpu_custom_call.1} parent=1 // loop_footer_branch
      %15 = sbr.rel target = $region3
    $region8: #{tpu_custom_call.1} parent=1 // loop_exit
      _
    %312 = vsyncpa [#allocation3], 1
    %s313 = scalar_lea.sflag [#allocation3], 1
    %314 = vsyncpa %s313, 1
    %315 = vsyncpa [#allocation4], 1
    %s316 = scalar_lea.sflag [#allocation4], 1
    %317 = vsyncpa %s316, 1

</llo_original>
